<compile_context>
chip_gen: v7x
topology: tpu7x:2x2x1
jax: 0.10.0
libtpu: 0.0.40
codegen_flags: <defaults>
</compile_context>

<pallas_src>
import functools
import math

import jax
import jax.numpy as jnp
from jax.experimental import pallas as pl
from jax.experimental.pallas import tpu as pltpu


_LANE = 128
_FALLBACK_TMP_BUDGET = 2 * 1024 * 1024   # bytes for the (rt, lt_out, pool) relayout temp


def _sublane(dtype):
    # Sublane packing granule: 8 rows for 4-byte, 16 for 2-byte, 32 for 1-byte dtypes.
    return max(8, 32 // jnp.dtype(dtype).itemsize)


def _round_down(x, m):
    return (x // m) * m


def _round_up(x, m):
    return ((x + m - 1) // m) * m


def _divisors(n):
    ds = []
    i = 1
    while i * i <= n:
        if n % i == 0:
            ds.append(i)
            if i != n // i:
                ds.append(n // i)
        i += 1
    return sorted(ds)


@functools.lru_cache(maxsize=None)
def _vmem_budget_and_limit():
    """Per-generation budget for the double-buffered in+out tile working set,
    plus the Mosaic scoped-VMEM limit to request (budget * ~2 + headroom)."""
    cap = None
    try:
        cap = int(pltpu.get_tpu_info().vmem_capacity_bytes)
    except Exception:
        cap = None
    if cap is not None and cap >= 96 * 1024 * 1024:
        # v5e / v6e: 128 MiB physical VMEM per core.
        return 32 * 1024 * 1024, 80 * 1024 * 1024
    # v7x (64 MiB per TC) or unknown hardware: stay conservative.
    return 24 * 1024 * 1024, 48 * 1024 * 1024


def _fold_factor(rows, l, l_out, pool_size):
    """Rows-onto-lanes fold factor g: reshape (rows, l) -> (rows//g, g*l).

    Only legal when l == l_out * pool_size (pool windows never straddle folded
    row boundaries).  Prefer the smallest divisor g of rows that makes the
    folded output width a multiple of 128 (unmasked lane-dense stores, long
    DMA bursts); otherwise, for very short outputs, densify up to one vreg.
    """
    if rows <= 1 or l_out <= 0 or l != l_out * pool_size or l_out % _LANE == 0:
        return 1
    m = _LANE // math.gcd(l_out, _LANE)
    divs = _divisors(rows)
    exact = [g for g in divs if g % m == 0]
    if exact:
        return min(exact)
    if l_out < _LANE:
        ok = [g for g in divs if g > 1 and g * l_out <= _LANE]
        if ok:
            return max(ok)
    return 1


def _maxpool1d_kernel_strided(x_ref, o_ref, *, pool_size, out_width):
    """Lane-dense reduction: pool_size lane-strided slices + elementwise max (VPU).

    x_ref: (row_tile, lt_in) with L on lanes; o_ref: (row_tile, out_width).
    Window j of a row = max_k x[row, j*pool_size + k]; slice k is lane-dense.
    """
    acc = x_ref[:, pl.ds(0, out_width, stride=pool_size)]
    for k in range(1, pool_size):
        acc = jnp.maximum(acc, x_ref[:, pl.ds(k, out_width, stride=pool_size)])
    o_ref[...] = acc


def _maxpool1d_kernel_reshape(x_ref, o_ref, *, pool_size, out_width):
    """Fallback reduction: windowed reshape + max (always lowers; small XLU temp)."""
    x = x_ref[:, : out_width * pool_size]
    o_ref[...] = jnp.max(x.reshape(x.shape[0], out_width, pool_size), axis=-1)


@functools.lru_cache(maxsize=None)
def _strided_supported(pool_size, dtype_name):
    """Compile + run a tiny strided-slice kernel once (eagerly) to check whether
    this Mosaic build lowers lane-strided vector loads.  The probe is a few KiB,
    so a failure here can only be a lowering rejection, never a VMEM OOM, and it
    works even when the real wrapper call is inside jax.jit."""
    if pool_size == 1:
        return True
    dtype = jnp.dtype(dtype_name)
    rt, lo = 8, _LANE
    try:
        fn = pl.pallas_call(
            functools.partial(_maxpool1d_kernel_strided,
                              pool_size=pool_size, out_width=lo),
            out_shape=jax.ShapeDtypeStruct((rt, lo), dtype),
        )
        jax.block_until_ready(fn(jnp.zeros((rt, lo * pool_size), dtype)))
        return True
    except Exception:
        return False


def max_pool1d_pallas(x, pool_size, *, vmem_budget_bytes=None):
    """F.max_pool1d(x, kernel_size=pool_size, stride=pool_size); x is (N, C, L).

    Matches PyTorch semantics with ceil_mode=False: the L % pool_size remainder
    is dropped (those trailing lanes are simply never read by the kernel).
    `vmem_budget_bytes` overrides the per-generation tile budget (testing).
    """
    assert pool_size >= 1
    n, c, l = x.shape
    l_out = l // pool_size
    if l_out == 0:
        return jnp.zeros((n, c, 0), x.dtype)
    if pool_size == 1:
        return x                                   # identity: avoid an HBM copy

    rows = n * c
    itemsize = jnp.dtype(x.dtype).itemsize
    sub = _sublane(x.dtype)
    budget, vmem_limit = _vmem_budget_and_limit()
    if vmem_budget_bytes is not None:
        budget = int(vmem_budget_bytes)

    # ---- lane-density fold: move rows onto the lane axis when l_out is narrow
    g = _fold_factor(rows, l, l_out, pool_size)
    R, Lr, Lo = rows // g, g * l, g * l_out
    x2 = x.reshape(R, Lr)                          # contiguous reshape: no HBM pass

    # ---- tile sizing: fill the double-buffered VMEM budget -------------------
    # Bytes per (row, output-lane): pool_size input lanes + 1 output lane, x2 buffers.
    unit = 2 * (pool_size + 1) * itemsize
    max_units = max(budget // unit, sub * _LANE)   # never below one (8,128) tile

    rt_full_l = max_units // Lo                    # rows per block with full-extent L
    if rt_full_l >= min(sub, R):
        # Row-tiled, full-extent L blocks (budget alone drives the row tile).
        row_tile = R if rt_full_l >= R else min(R, _round_down(rt_full_l, sub))
        lt_out, lt_in, grid_l = Lo, Lr, 1
    else:
        # L is long relative to the budget: minimal legal row tile, tile L so the
        # output tile stays a multiple of 128 (lane-dense, unmasked stores).
        row_tile = min(R, sub)
        lanes = max(_LANE, _round_down(max_units // row_tile, _LANE))
        if lanes >= Lo:
            lt_out, lt_in, grid_l = Lo, Lr, 1
        else:
            lt_out = lanes
            lt_in = lt_out * pool_size             # windows never straddle L blocks
            grid_l = pl.cdiv(Lo, lt_out)
    grid_rows = pl.cdiv(R, row_tile)

    # ---- never collapse to a single block: give v7x megacore >=2 parallel blocks
    if grid_rows * grid_l == 1 and R >= 2 * sub:
        row_tile = _round_up(pl.cdiv(R, 2), sub)
        grid_rows = pl.cdiv(R, row_tile)

    cost = pl.CostEstimate(
        flops=rows * l_out * (pool_size - 1),
        transcendentals=0,
        bytes_accessed=rows * l_out * (pool_size + 1) * itemsize,
    )

    def build(body, rt):
        return pl.pallas_call(
            functools.partial(body, pool_size=pool_size, out_width=lt_out),
            out_shape=jax.ShapeDtypeStruct((R, Lo), x.dtype),
            grid=(pl.cdiv(R, rt), grid_l),
            in_specs=[pl.BlockSpec((rt, lt_in), lambda i, j: (i, j))],
            out_specs=pl.BlockSpec((rt, lt_out), lambda i, j: (i, j)),
            compiler_params=pltpu.CompilerParams(
                dimension_semantics=("parallel", "parallel"),
                vmem_limit_bytes=vmem_limit),
            cost_estimate=cost,
        )

    # Lane-strided slices keep the reduction lane-dense on the VPU.  For large
    # pool_size the per-output-vreg lane gathers scale with pool_size and could
    # bind on the 2 XLUs of v6e/v7x before HBM does; a log2(pool) pairwise
    # pltpu.roll tree would cut that, but this block is used with small pools
    # and the op stays HBM-bound there.
    if _strided_supported(pool_size, jnp.dtype(x.dtype).name):
        out2 = build(_maxpool1d_kernel_strided, row_tile)(x2)
    else:
        # Reshape fallback: size rt from an explicit byte budget for the
        # (rt, lt_out, pool) relayout temporary instead of a magic constant.
        rt_fb = _round_down(
            _FALLBACK_TMP_BUDGET // max(lt_out * pool_size * itemsize, 1), sub)
        rt_fb = max(min(row_tile, rt_fb), min(R, sub))
        out2 = build(_maxpool1d_kernel_reshape, rt_fb)(x2)

    return out2.reshape(n, c, l_out)


if __name__ == "__main__":
    key = jax.random.PRNGKey(0)
    k0, k1, k2, k3 = jax.random.split(key, 4)

    def ref_maxpool1d(a, p):
        nn, cc, ll = a.shape
        lo = ll // p
        return jnp.max(a[:, :, : lo * p].reshape(nn, cc, lo, p), axis=-1)

    # 1) Pool1DBlock(pool_size=2) at the module's nominal small shape (N,C,L)=(2,4,16).
    pool_size = 2
    N, C, L = 2, 4, 16
    x = jax.random.normal(k0, (N, C, L), dtype=jnp.float32)
    out = jax.block_until_ready(max_pool1d_pallas(x, pool_size))
    assert out.shape == (N, C, L // pool_size), out.shape
    assert jnp.allclose(out, ref_maxpool1d(x, pool_size)), "mismatch (case 1)"

    # 2) Remainder length (L % pool != 0), rows not a multiple of 8 -> partial
    #    row blocks and the >=2-block megacore split path.
    x_b = jax.random.normal(k1, (3, 10, 20), dtype=jnp.float32)   # rows=30, l_out=6
    out_b = jax.block_until_ready(max_pool1d_pallas(x_b, 3))
    assert out_b.shape == (3, 10, 6), out_b.shape
    assert jnp.allclose(out_b, ref_maxpool1d(x_b, 3)), "mismatch (case 2)"

    # 3) Force L-axis tiling (tiny budget override) with a partial last L block
    #    and an L % pool remainder -- guards the no-window-straddles-blocks logic.
    x_c = jax.random.normal(k2, (1, 8, 515), dtype=jnp.float32)   # l_out=257
    out_c = jax.block_until_ready(
        max_pool1d_pallas(x_c, 2, vmem_budget_bytes=16 * 1024))
    assert out_c.shape == (1, 8, 257), out_c.shape
    assert jnp.allclose(out_c, ref_maxpool1d(x_c, 2)), "mismatch (case 3)"

    # 4) bf16 + pool_size=4 + exact lane-density fold (g*l_out multiple of 128).
    x_d = jax.random.normal(k3, (2, 16, 32), dtype=jnp.float32).astype(jnp.bfloat16)
    out_d = jax.block_until_ready(max_pool1d_pallas(x_d, 4))
    assert out_d.shape == (2, 16, 8), out_d.shape
    assert jnp.array_equal(out_d, ref_maxpool1d(x_d, 4)), "mismatch (case 4)"

    print("KERNEL_OK")
</pallas_src>

<mosaic_0001>
module attributes {stable_mosaic.version = 11 : i64} {
  func.func @_maxpool1d_kernel_strided(%arg0: memref<8x256xf32, #tpu.memory_space<vmem>>, %arg1: memref<8x128xf32, #tpu.memory_space<vmem>>) attributes {dimension_semantics = [], scalar_prefetch = 0 : i64, scratch_operands = 0 : i64, tpu.core_type = #tpu.core_type<tc>} {
    %c0 = arith.constant 0 : index
    %c0_0 = arith.constant 0 : index
    %0 = tpu.strided_load %arg0[%c0, %c0_0] {strides = array<i32: 1, 2>} : memref<8x256xf32, #tpu.memory_space<vmem>>, vector<8x128xf32>
    %c0_1 = arith.constant 0 : index
    %c1 = arith.constant 1 : index
    %1 = tpu.strided_load %arg0[%c0_1, %c1] {strides = array<i32: 1, 2>} : memref<8x256xf32, #tpu.memory_space<vmem>>, vector<8x128xf32>
    %2 = arith.maximumf %0, %1 : vector<8x128xf32>
    %c0_2 = arith.constant 0 : index
    %c0_3 = arith.constant 0 : index
    %3 = vector.load %arg1[%c0_2, %c0_3] : memref<8x128xf32, #tpu.memory_space<vmem>>, vector<8x128xf32>
    tpu.vector_store %arg1[%c0_2, %c0_3], %2 {strides = array<i32>} : memref<8x128xf32, #tpu.memory_space<vmem>>, vector<8x128xf32>,
    return
  }
}

module attributes {stable_mosaic.version = 11 : i64} {
  func.func @_maxpool1d_kernel_reshape(%arg0: i32, %arg1: i32, %arg2: memref<1x128xf32, #tpu.memory_space<vmem>>, %arg3: memref<1x64xf32, #tpu.memory_space<vmem>>) attributes {dimension_semantics = [#tpu.dimension_semantics<parallel>, #tpu.dimension_semantics<parallel>], iteration_bounds = array<i64: 1, 1>, scalar_prefetch = 0 : i64, scratch_operands = 0 : i64, tpu.core_type = #tpu.core_type<tc>, window_params = [{transform_indices = @transform_0, window_bounds = array<i64: 1, 128>}, {transform_indices = @transform_1, window_bounds = array<i64: 1, 64>}]} {
    %c0 = arith.constant 0 : index
    %c0_0 = arith.constant 0 : index
    %0 = vector.load %arg2[%c0, %c0_0] : memref<1x128xf32, #tpu.memory_space<vmem>>, vector<1x128xf32>
    %1 = vector.shape_cast %0 : vector<1x128xf32> to vector<1x64x2xf32>
    %cst = arith.constant dense<0xFF800000> : vector<1x64xf32>
    %2 = vector.multi_reduction <maximumf>, %1, %cst [2] : vector<1x64x2xf32> to vector<1x64xf32>
    %c0_1 = arith.constant 0 : index
    %c0_2 = arith.constant 0 : index
    %3 = vector.load %arg3[%c0_1, %c0_2] : memref<1x64xf32, #tpu.memory_space<vmem>>, vector<1x64xf32>
    tpu.vector_store %arg3[%c0_1, %c0_2], %2 {strides = array<i32>} : memref<1x64xf32, #tpu.memory_space<vmem>>, vector<1x64xf32>,
    return
  }
  func.func @transform_0(%arg0: i32, %arg1: i32) -> (i32, i32) {
    %c0_i32 = arith.constant 0 : i32
    return %arg0, %arg1 : i32, i32
  }
  func.func @transform_1(%arg0: i32, %arg1: i32) -> (i32, i32) {
    %c0_i32 = arith.constant 0 : i32
    return %arg0, %arg1 : i32, i32
  }
}

</mosaic_0001>

<llo_original>
// kernel: tpu_custom_call.1
$region0: #{tpu_custom_call.1}
  #allocation0 [shape = 'u32[]', space=smem, size = 0x4, offset = 0x4, fixed_abs, tag = 'smem constant byte address 0x4 - core index']
  #allocation1 [shape = 'u32[144,128]{1,0:T(1,128)}', space=vmem, size = 0x12000, scoped, tag = 'internal scratch']
  %s0 = inlined_call_operand.hbm [shape: f32[1,128], index: 0, kind: input, shape index: {}]
  %s1 = inlined_call_operand.hbm [shape: f32[1,64], index: 1, kind: output, shape index: {}]
  %s2 = sld [smem:[#allocation0]]
  $region18: #{tpu_custom_call.1} parent=0
    _
  %s4 = ssub.s32 1, %s2
  %s5 = scalar_select 0, %s4, %s2
  $region1: #{tpu_custom_call.1} parent=0
    #allocation2 [shape = 'u8[512]{0}', space=vmem, size = 0x400, scoped, tag = 'input window, operand 0, single buffered']
    #allocation3 [shape = 's32[1]{0}', space=sflag, size = 0x4, scoped, tag = 'scoped memory for tpu_custom_call.1']
    #allocation4 [shape = 's32[1]{0}', space=sflag, size = 0x4, scoped, tag = 'scoped memory for tpu_custom_call.1']
    #allocation5 [shape = 'u8[512]{0}', space=vmem, size = 0x400, scoped, tag = 'output window, operand 0, single buffered']
    %6 = vsyncpa [#allocation3], 0
    %7 = vsyncpa [#allocation4], 0
    // Predicated region
    $region2: #{tpu_custom_call.1} parent=1 // pred_check
      _
    $region3: #{tpu_custom_call.1} parent=1 // pred_check_branch
      %9 = sbr.rel (0) target = $region5
    $region4: #{tpu_custom_call.1} parent=1 // pred_region
      %s11 = ssub.s32 16, 16
      %12 = vsyncadd [#allocation3], %s11
      %s14 = sshll.u32 [#allocation2], 4
      %s15 = int_to_ptr.vmem [resolvable:$true] %s14
      %17 = dma.hbm_to_vmem [thread:$0]  %s0, 16, %s15, [#allocation3]
    $region5: #{tpu_custom_call.1} parent=1 // pred_fallthru
      _
    // Predicated region
    $region6: #{tpu_custom_call.1} parent=1 // pred_check
      _
    $region7: #{tpu_custom_call.1} parent=1 // pred_check_branch
      %19 = sbr.rel (0) target = $region9
    $region8: #{tpu_custom_call.1} parent=1 // pred_region
      %20 = dma.done [#allocation3], 16
    $region9: #{tpu_custom_call.1} parent=1 // pred_fallthru
      _
    %v21 = vld [vmem:[#allocation2] sm:$0x1]
    %23 = vrot.lane.b32.xlu0 %v21, 126
    %v24 = vpop.permute.xlu0 %23
    %25 = vrot.lane.b32.xlu0 %v21, 124
    %v26 = vpop.permute.xlu0 %25
    %27 = vrot.lane.b32.xlu0 %v21, 122
    %v28 = vpop.permute.xlu0 %27
    %29 = vrot.lane.b32.xlu0 %v21, 120
    %v30 = vpop.permute.xlu0 %29
    %31 = vrot.lane.b32.xlu0 %v21, 118
    %v32 = vpop.permute.xlu0 %31
    %33 = vrot.lane.b32.xlu0 %v21, 116
    %v34 = vpop.permute.xlu0 %33
    %35 = vrot.lane.b32.xlu0 %v21, 114
    %v36 = vpop.permute.xlu0 %35
    %37 = vrot.lane.b32.xlu0 %v21, 112
    %v38 = vpop.permute.xlu0 %37
    %39 = vrot.lane.b32.xlu0 %v21, 110
    %v40 = vpop.permute.xlu0 %39
    %41 = vrot.lane.b32.xlu0 %v21, 108
    %v42 = vpop.permute.xlu0 %41
    %43 = vrot.lane.b32.xlu0 %v21, 106
    %v44 = vpop.permute.xlu0 %43
    %45 = vrot.lane.b32.xlu0 %v21, 104
    %v46 = vpop.permute.xlu0 %45
    %47 = vrot.lane.b32.xlu0 %v21, 102
    %v48 = vpop.permute.xlu0 %47
    %49 = vrot.lane.b32.xlu0 %v21, 100
    %v50 = vpop.permute.xlu0 %49
    %51 = vrot.lane.b32.xlu0 %v21, 98
    %v52 = vpop.permute.xlu0 %51
    %53 = vrot.lane.b32.xlu0 %v21, 96
    %v54 = vpop.permute.xlu0 %53
    %55 = vrot.lane.b32.xlu0 %v21, 94
    %v56 = vpop.permute.xlu0 %55
    %57 = vrot.lane.b32.xlu0 %v21, 92
    %v58 = vpop.permute.xlu0 %57
    %59 = vrot.lane.b32.xlu0 %v21, 90
    %v60 = vpop.permute.xlu0 %59
    %61 = vrot.lane.b32.xlu0 %v21, 88
    %v62 = vpop.permute.xlu0 %61
    %63 = vrot.lane.b32.xlu0 %v21, 86
    %v64 = vpop.permute.xlu0 %63
    %65 = vrot.lane.b32.xlu0 %v21, 84
    %v66 = vpop.permute.xlu0 %65
    %67 = vrot.lane.b32.xlu0 %v21, 82
    %v68 = vpop.permute.xlu0 %67
    %69 = vrot.lane.b32.xlu0 %v21, 80
    %v70 = vpop.permute.xlu0 %69
    %71 = vrot.lane.b32.xlu0 %v21, 78
    %v72 = vpop.permute.xlu0 %71
    %73 = vrot.lane.b32.xlu0 %v21, 76
    %v74 = vpop.permute.xlu0 %73
    %75 = vrot.lane.b32.xlu0 %v21, 74
    %v76 = vpop.permute.xlu0 %75
    %77 = vrot.lane.b32.xlu0 %v21, 72
    %v78 = vpop.permute.xlu0 %77
    %79 = vrot.lane.b32.xlu0 %v21, 70
    %v80 = vpop.permute.xlu0 %79
    %81 = vrot.lane.b32.xlu0 %v21, 68
    %v82 = vpop.permute.xlu0 %81
    %83 = vrot.lane.b32.xlu0 %v21, 66
    %v84 = vpop.permute.xlu0 %83
    %85 = vrot.lane.b32.xlu0 %v21, 64
    %v86 = vpop.permute.xlu0 %85
    %87 = vrot.lane.b32.xlu0 %v21, 62
    %v88 = vpop.permute.xlu0 %87
    %89 = vrot.lane.b32.xlu0 %v21, 60
    %v90 = vpop.permute.xlu0 %89
    %91 = vrot.lane.b32.xlu0 %v21, 58
    %v92 = vpop.permute.xlu0 %91
    %93 = vrot.lane.b32.xlu0 %v21, 56
    %v94 = vpop.permute.xlu0 %93
    %95 = vrot.lane.b32.xlu0 %v21, 54
    %v96 = vpop.permute.xlu0 %95
    %97 = vrot.lane.b32.xlu0 %v21, 52
    %v98 = vpop.permute.xlu0 %97
    %99 = vrot.lane.b32.xlu0 %v21, 50
    %v100 = vpop.permute.xlu0 %99
    %101 = vrot.lane.b32.xlu0 %v21, 48
    %v102 = vpop.permute.xlu0 %101
    %103 = vrot.lane.b32.xlu0 %v21, 46
    %v104 = vpop.permute.xlu0 %103
    %105 = vrot.lane.b32.xlu0 %v21, 44
    %v106 = vpop.permute.xlu0 %105
    %107 = vrot.lane.b32.xlu0 %v21, 42
    %v108 = vpop.permute.xlu0 %107
    %109 = vrot.lane.b32.xlu0 %v21, 40
    %v110 = vpop.permute.xlu0 %109
    %111 = vrot.lane.b32.xlu0 %v21, 38
    %v112 = vpop.permute.xlu0 %111
    %113 = vrot.lane.b32.xlu0 %v21, 36
    %v114 = vpop.permute.xlu0 %113
    %115 = vrot.lane.b32.xlu0 %v21, 34
    %v116 = vpop.permute.xlu0 %115
    %117 = vrot.lane.b32.xlu0 %v21, 32
    %v118 = vpop.permute.xlu0 %117
    %119 = vrot.lane.b32.xlu0 %v21, 30
    %v120 = vpop.permute.xlu0 %119
    %121 = vrot.lane.b32.xlu0 %v21, 28
    %v122 = vpop.permute.xlu0 %121
    %123 = vrot.lane.b32.xlu0 %v21, 26
    %v124 = vpop.permute.xlu0 %123
    %125 = vrot.lane.b32.xlu0 %v21, 24
    %v126 = vpop.permute.xlu0 %125
    %127 = vrot.lane.b32.xlu0 %v21, 22
    %v128 = vpop.permute.xlu0 %127
    %129 = vrot.lane.b32.xlu0 %v21, 20
    %v130 = vpop.permute.xlu0 %129
    %131 = vrot.lane.b32.xlu0 %v21, 18
    %v132 = vpop.permute.xlu0 %131
    %133 = vrot.lane.b32.xlu0 %v21, 16
    %v134 = vpop.permute.xlu0 %133
    %135 = vrot.lane.b32.xlu0 %v21, 14
    %v136 = vpop.permute.xlu0 %135
    %137 = vrot.lane.b32.xlu0 %v21, 12
    %v138 = vpop.permute.xlu0 %137
    %139 = vrot.lane.b32.xlu0 %v21, 10
    %v140 = vpop.permute.xlu0 %139
    %141 = vrot.lane.b32.xlu0 %v21, 8
    %v142 = vpop.permute.xlu0 %141
    %143 = vrot.lane.b32.xlu0 %v21, 6
    %v144 = vpop.permute.xlu0 %143
    %145 = vrot.lane.b32.xlu0 %v21, 4
    %v146 = vpop.permute.xlu0 %145
    %147 = vrot.lane.b32.xlu0 %v21, 2
    %v148 = vpop.permute.xlu0 %147
    %v149 = vcombine.low %v21, %v24
    %v150 = vcombine.low %v26, %v28
    %v151 = vcombine.low %v30, %v32
    %v152 = vcombine.low %v34, %v36
    %v154 = vunpack.c.l.s4 1966171168
    %v155 = vunpack.c.0.s8 %v154
    %v156 = vlaneseq
    %v157 = vshrl.u32 %v156, 7
    %v158 = vsub.s32 %v155, %v157
    %v159 = vrot.slane %v149, %v158
    %v161 = vunpack.c.l.s4 1966171168
    %v162 = vunpack.c.0.s8 %v161
    %v163 = vlaneseq
    %v164 = vshrl.u32 %v163, 7
    %v165 = vsub.s32 %v162, %v164
    %v166 = vrot.slane %v150, %v165
    %v168 = vunpack.c.l.s4 1966171168
    %v169 = vunpack.c.0.s8 %v168
    %v170 = vlaneseq
    %v171 = vshrl.u32 %v170, 7
    %v172 = vsub.s32 %v169, %v171
    %v173 = vrot.slane %v151, %v172
    %v175 = vunpack.c.l.s4 1966171168
    %v176 = vunpack.c.0.s8 %v175
    %v177 = vlaneseq
    %v178 = vshrl.u32 %v177, 7
    %v179 = vsub.s32 %v176, %v178
    %v180 = vrot.slane %v152, %v179
    %v181 = vcombine.low %v159, %v166
    %v182 = vcombine.low %v173, %v180
    %v184 = vunpack.c.l.s4 1966171168
    %v185 = vunpack.c.0.s8 %v184
    %v186 = vlaneseq
    %v187 = vshrl.u32 %v186, 7
    %v188 = vsub.s32 %v185, %v187
    %v189 = vrot.slane %v181, %v188
    %v191 = vunpack.c.l.s4 1966171168
    %v192 = vunpack.c.0.s8 %v191
    %v193 = vlaneseq
    %v194 = vshrl.u32 %v193, 7
    %v195 = vsub.s32 %v192, %v194
    %v196 = vrot.slane %v182, %v195
    %v197 = vcombine.low %v189, %v196
    %v198 = vcombine.low %v38, %v40
    %v199 = vcombine.low %v42, %v44
    %v200 = vcombine.low %v46, %v48
    %v201 = vcombine.low %v50, %v52
    %v203 = vunpack.c.l.s4 1966171168
    %v204 = vunpack.c.0.s8 %v203
    %v205 = vlaneseq
    %v206 = vshrl.u32 %v205, 7
    %v207 = vsub.s32 %v204, %v206
    %v208 = vrot.slane %v198, %v207
    %v210 = vunpack.c.l.s4 1966171168
    %v211 = vunpack.c.0.s8 %v210
    %v212 = vlaneseq
    %v213 = vshrl.u32 %v212, 7
    %v214 = vsub.s32 %v211, %v213
    %v215 = vrot.slane %v199, %v214
    %v217 = vunpack.c.l.s4 1966171168
    %v218 = vunpack.c.0.s8 %v217
    %v219 = vlaneseq
    %v220 = vshrl.u32 %v219, 7
    %v221 = vsub.s32 %v218, %v220
    %v222 = vrot.slane %v200, %v221
    %v224 = vunpack.c.l.s4 1966171168
    %v225 = vunpack.c.0.s8 %v224
    %v226 = vlaneseq
    %v227 = vshrl.u32 %v226, 7
    %v228 = vsub.s32 %v225, %v227
    %v229 = vrot.slane %v201, %v228
    %v230 = vcombine.low %v208, %v215
    %v231 = vcombine.low %v222, %v229
    %v233 = vunpack.c.l.s4 1966171168
    %v234 = vunpack.c.0.s8 %v233
    %v235 = vlaneseq
    %v236 = vshrl.u32 %v235, 7
    %v237 = vsub.s32 %v234, %v236
    %v238 = vrot.slane %v230, %v237
    %v240 = vunpack.c.l.s4 1966171168
    %v241 = vunpack.c.0.s8 %v240
    %v242 = vlaneseq
    %v243 = vshrl.u32 %v242, 7
    %v244 = vsub.s32 %v241, %v243
    %v245 = vrot.slane %v231, %v244
    %v246 = vcombine.low %v238, %v245
    %v247 = vcombine.low %v54, %v56
    %v248 = vcombine.low %v58, %v60
    %v249 = vcombine.low %v62, %v64
    %v250 = vcombine.low %v66, %v68
    %v252 = vunpack.c.l.s4 1966171168
    %v253 = vunpack.c.0.s8 %v252
    %v254 = vlaneseq
    %v255 = vshrl.u32 %v254, 7
    %v256 = vsub.s32 %v253, %v255
    %v257 = vrot.slane %v247, %v256
    %v259 = vunpack.c.l.s4 1966171168
    %v260 = vunpack.c.0.s8 %v259
    %v261 = vlaneseq
    %v262 = vshrl.u32 %v261, 7
    %v263 = vsub.s32 %v260, %v262
    %v264 = vrot.slane %v248, %v263
    %v266 = vunpack.c.l.s4 1966171168
    %v267 = vunpack.c.0.s8 %v266
    %v268 = vlaneseq
    %v269 = vshrl.u32 %v268, 7
    %v270 = vsub.s32 %v267, %v269
    %v271 = vrot.slane %v249, %v270
    %v273 = vunpack.c.l.s4 1966171168
    %v274 = vunpack.c.0.s8 %v273
    %v275 = vlaneseq
    %v276 = vshrl.u32 %v275, 7
    %v277 = vsub.s32 %v274, %v276
    %v278 = vrot.slane %v250, %v277
    %v279 = vcombine.low %v257, %v264
    %v280 = vcombine.low %v271, %v278
    %v282 = vunpack.c.l.s4 1966171168
    %v283 = vunpack.c.0.s8 %v282
    %v284 = vlaneseq
    %v285 = vshrl.u32 %v284, 7
    %v286 = vsub.s32 %v283, %v285
    %v287 = vrot.slane %v279, %v286
    %v289 = vunpack.c.l.s4 1966171168
    %v290 = vunpack.c.0.s8 %v289
    %v291 = vlaneseq
    %v292 = vshrl.u32 %v291, 7
    %v293 = vsub.s32 %v290, %v292
    %v294 = vrot.slane %v280, %v293
    %v295 = vcombine.low %v287, %v294
    %v296 = vcombine.low %v70, %v72
    %v297 = vcombine.low %v74, %v76
    %v298 = vcombine.low %v78, %v80
    %v299 = vcombine.low %v82, %v84
    %v301 = vunpack.c.l.s4 1966171168
    %v302 = vunpack.c.0.s8 %v301
    %v303 = vlaneseq
    %v304 = vshrl.u32 %v303, 7
    %v305 = vsub.s32 %v302, %v304
    %v306 = vrot.slane %v296, %v305
    %v308 = vunpack.c.l.s4 1966171168
    %v309 = vunpack.c.0.s8 %v308
    %v310 = vlaneseq
    %v311 = vshrl.u32 %v310, 7
    %v312 = vsub.s32 %v309, %v311
    %v313 = vrot.slane %v297, %v312
    %v315 = vunpack.c.l.s4 1966171168
    %v316 = vunpack.c.0.s8 %v315
    %v317 = vlaneseq
    %v318 = vshrl.u32 %v317, 7
    %v319 = vsub.s32 %v316, %v318
    %v320 = vrot.slane %v298, %v319
    %v322 = vunpack.c.l.s4 1966171168
    %v323 = vunpack.c.0.s8 %v322
    %v324 = vlaneseq
    %v325 = vshrl.u32 %v324, 7
    %v326 = vsub.s32 %v323, %v325
    %v327 = vrot.slane %v299, %v326
    %v328 = vcombine.low %v306, %v313
    %v329 = vcombine.low %v320, %v327
    %v331 = vunpack.c.l.s4 1966171168
    %v332 = vunpack.c.0.s8 %v331
    %v333 = vlaneseq
    %v334 = vshrl.u32 %v333, 7
    %v335 = vsub.s32 %v332, %v334
    %v336 = vrot.slane %v328, %v335
    %v338 = vunpack.c.l.s4 1966171168
    %v339 = vunpack.c.0.s8 %v338
    %v340 = vlaneseq
    %v341 = vshrl.u32 %v340, 7
    %v342 = vsub.s32 %v339, %v341
    %v343 = vrot.slane %v329, %v342
    %v344 = vcombine.low %v336, %v343
    %v345 = vcombine.low %v86, %v88
    %v346 = vcombine.low %v90, %v92
    %v347 = vcombine.low %v94, %v96
    %v348 = vcombine.low %v98, %v100
    %v350 = vunpack.c.l.s4 1966171168
    %v351 = vunpack.c.0.s8 %v350
    %v352 = vlaneseq
    %v353 = vshrl.u32 %v352, 7
    %v354 = vsub.s32 %v351, %v353
    %v355 = vrot.slane %v345, %v354
    %v357 = vunpack.c.l.s4 1966171168
    %v358 = vunpack.c.0.s8 %v357
    %v359 = vlaneseq
    %v360 = vshrl.u32 %v359, 7
    %v361 = vsub.s32 %v358, %v360
    %v362 = vrot.slane %v346, %v361
    %v364 = vunpack.c.l.s4 1966171168
    %v365 = vunpack.c.0.s8 %v364
    %v366 = vlaneseq
    %v367 = vshrl.u32 %v366, 7
    %v368 = vsub.s32 %v365, %v367
    %v369 = vrot.slane %v347, %v368
    %v371 = vunpack.c.l.s4 1966171168
    %v372 = vunpack.c.0.s8 %v371
    %v373 = vlaneseq
    %v374 = vshrl.u32 %v373, 7
    %v375 = vsub.s32 %v372, %v374
    %v376 = vrot.slane %v348, %v375
    %v377 = vcombine.low %v355, %v362
    %v378 = vcombine.low %v369, %v376
    %v380 = vunpack.c.l.s4 1966171168
    %v381 = vunpack.c.0.s8 %v380
    %v382 = vlaneseq
    %v383 = vshrl.u32 %v382, 7
    %v384 = vsub.s32 %v381, %v383
    %v385 = vrot.slane %v377, %v384
    %v387 = vunpack.c.l.s4 1966171168
    %v388 = vunpack.c.0.s8 %v387
    %v389 = vlaneseq
    %v390 = vshrl.u32 %v389, 7
    %v391 = vsub.s32 %v388, %v390
    %v392 = vrot.slane %v378, %v391
    %v393 = vcombine.low %v385, %v392
    %v394 = vcombine.low %v102, %v104
    %v395 = vcombine.low %v106, %v108
    %v396 = vcombine.low %v110, %v112
    %v397 = vcombine.low %v114, %v116
    %v399 = vunpack.c.l.s4 1966171168
    %v400 = vunpack.c.0.s8 %v399
    %v401 = vlaneseq
    %v402 = vshrl.u32 %v401, 7
    %v403 = vsub.s32 %v400, %v402
    %v404 = vrot.slane %v394, %v403
    %v406 = vunpack.c.l.s4 1966171168
    %v407 = vunpack.c.0.s8 %v406
    %v408 = vlaneseq
    %v409 = vshrl.u32 %v408, 7
    %v410 = vsub.s32 %v407, %v409
    %v411 = vrot.slane %v395, %v410
    %v413 = vunpack.c.l.s4 1966171168
    %v414 = vunpack.c.0.s8 %v413
    %v415 = vlaneseq
    %v416 = vshrl.u32 %v415, 7
    %v417 = vsub.s32 %v414, %v416
    %v418 = vrot.slane %v396, %v417
    %v420 = vunpack.c.l.s4 1966171168
    %v421 = vunpack.c.0.s8 %v420
    %v422 = vlaneseq
    %v423 = vshrl.u32 %v422, 7
    %v424 = vsub.s32 %v421, %v423
    %v425 = vrot.slane %v397, %v424
    %v426 = vcombine.low %v404, %v411
    %v427 = vcombine.low %v418, %v425
    %v429 = vunpack.c.l.s4 1966171168
    %v430 = vunpack.c.0.s8 %v429
    %v431 = vlaneseq
    %v432 = vshrl.u32 %v431, 7
    %v433 = vsub.s32 %v430, %v432
    %v434 = vrot.slane %v426, %v433
    %v436 = vunpack.c.l.s4 1966171168
    %v437 = vunpack.c.0.s8 %v436
    %v438 = vlaneseq
    %v439 = vshrl.u32 %v438, 7
    %v440 = vsub.s32 %v437, %v439
    %v441 = vrot.slane %v427, %v440
    %v442 = vcombine.low %v434, %v441
    %v443 = vcombine.low %v118, %v120
    %v444 = vcombine.low %v122, %v124
    %v445 = vcombine.low %v126, %v128
    %v446 = vcombine.low %v130, %v132
    %v448 = vunpack.c.l.s4 1966171168
    %v449 = vunpack.c.0.s8 %v448
    %v450 = vlaneseq
    %v451 = vshrl.u32 %v450, 7
    %v452 = vsub.s32 %v449, %v451
    %v453 = vrot.slane %v443, %v452
    %v455 = vunpack.c.l.s4 1966171168
    %v456 = vunpack.c.0.s8 %v455
    %v457 = vlaneseq
    %v458 = vshrl.u32 %v457, 7
    %v459 = vsub.s32 %v456, %v458
    %v460 = vrot.slane %v444, %v459
    %v462 = vunpack.c.l.s4 1966171168
    %v463 = vunpack.c.0.s8 %v462
    %v464 = vlaneseq
    %v465 = vshrl.u32 %v464, 7
    %v466 = vsub.s32 %v463, %v465
    %v467 = vrot.slane %v445, %v466
    %v469 = vunpack.c.l.s4 1966171168
    %v470 = vunpack.c.0.s8 %v469
    %v471 = vlaneseq
    %v472 = vshrl.u32 %v471, 7
    %v473 = vsub.s32 %v470, %v472
    %v474 = vrot.slane %v446, %v473
    %v475 = vcombine.low %v453, %v460
    %v476 = vcombine.low %v467, %v474
    %v478 = vunpack.c.l.s4 1966171168
    %v479 = vunpack.c.0.s8 %v478
    %v480 = vlaneseq
    %v481 = vshrl.u32 %v480, 7
    %v482 = vsub.s32 %v479, %v481
    %v483 = vrot.slane %v475, %v482
    %v485 = vunpack.c.l.s4 1966171168
    %v486 = vunpack.c.0.s8 %v485
    %v487 = vlaneseq
    %v488 = vshrl.u32 %v487, 7
    %v489 = vsub.s32 %v486, %v488
    %v490 = vrot.slane %v476, %v489
    %v491 = vcombine.low %v483, %v490
    %v492 = vcombine.low %v134, %v136
    %v493 = vcombine.low %v138, %v140
    %v494 = vcombine.low %v142, %v144
    %v495 = vcombine.low %v146, %v148
    %v497 = vunpack.c.l.s4 1966171168
    %v498 = vunpack.c.0.s8 %v497
    %v499 = vlaneseq
    %v500 = vshrl.u32 %v499, 7
    %v501 = vsub.s32 %v498, %v500
    %v502 = vrot.slane %v492, %v501
    %v504 = vunpack.c.l.s4 1966171168
    %v505 = vunpack.c.0.s8 %v504
    %v506 = vlaneseq
    %v507 = vshrl.u32 %v506, 7
    %v508 = vsub.s32 %v505, %v507
    %v509 = vrot.slane %v493, %v508
    %v511 = vunpack.c.l.s4 1966171168
    %v512 = vunpack.c.0.s8 %v511
    %v513 = vlaneseq
    %v514 = vshrl.u32 %v513, 7
    %v515 = vsub.s32 %v512, %v514
    %v516 = vrot.slane %v494, %v515
    %v518 = vunpack.c.l.s4 1966171168
    %v519 = vunpack.c.0.s8 %v518
    %v520 = vlaneseq
    %v521 = vshrl.u32 %v520, 7
    %v522 = vsub.s32 %v519, %v521
    %v523 = vrot.slane %v495, %v522
    %v524 = vcombine.low %v502, %v509
    %v525 = vcombine.low %v516, %v523
    %v527 = vunpack.c.l.s4 1966171168
    %v528 = vunpack.c.0.s8 %v527
    %v529 = vlaneseq
    %v530 = vshrl.u32 %v529, 7
    %v531 = vsub.s32 %v528, %v530
    %v532 = vrot.slane %v524, %v531
    %v534 = vunpack.c.l.s4 1966171168
    %v535 = vunpack.c.0.s8 %v534
    %v536 = vlaneseq
    %v537 = vshrl.u32 %v536, 7
    %v538 = vsub.s32 %v535, %v537
    %v539 = vrot.slane %v525, %v538
    %v540 = vcombine.low %v532, %v539
    %vm549 = vcmask 15360
    %v550 = vsel %vm549, %v197, -inf
    %551 = vmax.xlane.f32.xlu0 %v550
    %v552 = vpop.xlane.xlu0 %551
    %v553 = vsel %vm549, %v246, -inf
    %554 = vmax.xlane.f32.xlu0 %v553
    %v555 = vpop.xlane.xlu0 %554
    %v556 = vsel %vm549, %v295, -inf
    %557 = vmax.xlane.f32.xlu0 %v556
    %v558 = vpop.xlane.xlu0 %557
    %v559 = vsel %vm549, %v344, -inf
    %560 = vmax.xlane.f32.xlu0 %v559
    %v561 = vpop.xlane.xlu0 %560
    %v562 = vsel %vm549, %v393, -inf
    %563 = vmax.xlane.f32.xlu0 %v562
    %v564 = vpop.xlane.xlu0 %563
    %v565 = vsel %vm549, %v442, -inf
    %566 = vmax.xlane.f32.xlu0 %v565
    %v567 = vpop.xlane.xlu0 %566
    %v568 = vsel %vm549, %v491, -inf
    %569 = vmax.xlane.f32.xlu0 %v568
    %v570 = vpop.xlane.xlu0 %569
    %v571 = vsel %vm549, %v540, -inf
    %572 = vmax.xlane.f32.xlu0 %v571
    %v573 = vpop.xlane.xlu0 %572
    %v582 = vlaneseq
    %v583 = vand.u32 %v582, 127
    %v584 = vlaneseq
    %v585 = vshrl.u32 %v584, 7
    %v586 = vsub.s32 %v583, %v585
    %v587 = vrot.slane %v552, %v586
    %v588 = vadd.s32 %v583, 4294967288
    %v589 = vlaneseq
    %v590 = vshrl.u32 %v589, 7
    %v591 = vsub.s32 %v588, %v590
    %v592 = vrot.slane %v555, %v591
    %vm593 = vcmask 130112
    %v594 = vsel %vm593, %v592, %v587
    %v595 = vadd.s32 %v583, 4294967280
    %v596 = vlaneseq
    %v597 = vshrl.u32 %v596, 7
    %v598 = vsub.s32 %v595, %v597
    %v599 = vrot.slane %v558, %v598
    %vm600 = vcmask 195712
    %v601 = vsel %vm600, %v599, %v594
    %v602 = vadd.s32 %v583, 4294967272
    %v603 = vlaneseq
    %v604 = vshrl.u32 %v603, 7
    %v605 = vsub.s32 %v602, %v604
    %v606 = vrot.slane %v561, %v605
    %vm607 = vcmask 261312
    %v608 = vsel %vm607, %v606, %v601
    %v609 = vadd.s32 %v583, 4294967264
    %v610 = vlaneseq
    %v611 = vshrl.u32 %v610, 7
    %v612 = vsub.s32 %v609, %v611
    %v613 = vrot.slane %v564, %v612
    %vm614 = vcmask 326912
    %v615 = vsel %vm614, %v613, %v608
    %v616 = vadd.s32 %v583, 4294967256
    %v617 = vlaneseq
    %v618 = vshrl.u32 %v617, 7
    %v619 = vsub.s32 %v616, %v618
    %v620 = vrot.slane %v567, %v619
    %vm621 = vcmask 392512
    %v622 = vsel %vm621, %v620, %v615
    %v623 = vadd.s32 %v583, 4294967248
    %v624 = vlaneseq
    %v625 = vshrl.u32 %v624, 7
    %v626 = vsub.s32 %v623, %v625
    %v627 = vrot.slane %v570, %v626
    %vm628 = vcmask 458112
    %v629 = vsel %vm628, %v627, %v622
    %v630 = vadd.s32 %v583, 4294967240
    %v631 = vlaneseq
    %v632 = vshrl.u32 %v631, 7
    %v633 = vsub.s32 %v630, %v632
    %v634 = vrot.slane %v573, %v633
    %vm635 = vcmask 523712
    %v636 = vsel %vm635, %v634, %v629
    %vm638 = vcmask 516096
    %639 = vst.msk [vmem:[#allocation5] sm:$0x1] %vm638, %v636
    // Predicated region
    $region10: #{tpu_custom_call.1} parent=1 // pred_check
      _
    $region11: #{tpu_custom_call.1} parent=1 // pred_check_branch
      %641 = sbr.rel (0) target = $region13
    $region12: #{tpu_custom_call.1} parent=1 // pred_region
      %s643 = ssub.s32 16, 16
      %644 = vsyncadd [#allocation4], %s643
      %s646 = sshll.u32 [#allocation5], 4
      %s647 = int_to_ptr.vmem [resolvable:$true] %s646
      %649 = dma.vmem_to_hbm [thread:$0]  %s647, 16, %s1, [#allocation4]
    $region13: #{tpu_custom_call.1} parent=1 // pred_fallthru
      _
    // Predicated region
    $region14: #{tpu_custom_call.1} parent=1 // pred_check
      _
    $region15: #{tpu_custom_call.1} parent=1 // pred_check_branch
      %651 = sbr.rel (0) target = $region17
    $region16: #{tpu_custom_call.1} parent=1 // pred_region
      %652 = dma.done [#allocation4], 16
    $region17: #{tpu_custom_call.1} parent=1 // pred_fallthru
      _
    %653 = vsyncpa [#allocation3], 1
    %654 = vsyncpa [#allocation4], 1

</llo_original>
